<compile_context>
chip_gen: v7x
topology: tpu7x:2x2x1
jax: 0.10.0
libtpu: 0.0.40
codegen_flags: <defaults>
</compile_context>

<pallas_src>
import functools

import jax
import jax.numpy as jnp
from jax import lax
from jax.experimental import pallas as pl
from jax.experimental.pallas import tpu as pltpu


def _round_up(x: int, m: int) -> int:
    return (x + m - 1) // m * m


def _cdiv(a: int, b: int) -> int:
    return (a + b - 1) // b


@functools.lru_cache(maxsize=None)
def _tpu_generation_info():
    """Best-effort (vmem_capacity_bytes, has_bf16_eup); conservative fallbacks."""
    kind = ""
    try:
        kind = jax.devices()[0].device_kind.lower()
    except Exception:
        pass
    vmem_bytes = None
    try:
        vmem_bytes = int(pltpu.get_tpu_info().vmem_capacity_bytes)
    except Exception:
        vmem_bytes = None
    if not vmem_bytes:
        # v5e / v6e: 128 MiB per TensorCore; v7x (and unknown): assume 64 MiB.
        vmem_bytes = 128 * 1024 * 1024 if ("v5" in kind or "v6" in kind) else 64 * 1024 * 1024
    # bf16 EUP (fast bf16 tanh) exists on v6e and later; keep f32 tanh on v5e and older.
    has_bf16_eup = not any(g in kind for g in ("v2", "v3", "v4", "v5"))
    return vmem_bytes, has_bf16_eup


def _single_buffering_supported() -> bool:
    if not hasattr(pl, "Buffered"):
        return False
    try:
        pl.BlockSpec((8, 128), lambda i: (0, 0), pipeline_mode=pl.Buffered(1))
        return True
    except Exception:
        return False


def _resident_spec(shape, single_buffer):
    """BlockSpec for a loop-invariant operand (constant index_map over the grid)."""
    index_map = lambda i: (0, 0)
    if single_buffer:
        # Double-buffering a constant block only wastes VMEM.
        return pl.BlockSpec(shape, index_map, pipeline_mode=pl.Buffered(1))
    return pl.BlockSpec(shape, index_map)


# ---------------------------------------------------------------------------
# Kernels
# ---------------------------------------------------------------------------
def _mlp_kernel_resident(x_ref, w1t_ref, b1_ref, w2t_ref, o_ref, *, tanh_bf16):
    # x_ref  : [TB, Dp] (streamed batch tile)
    # w1t_ref: [Dp, Hp] bf16 (resident)     b1_ref: [1, Hp] f32 (resident)
    # w2t_ref: [Hp, Cp] bf16 (resident)     o_ref : [TB, Cp]
    x = x_ref[...].astype(jnp.bfloat16)
    h = lax.dot_general(x, w1t_ref[...],
                        dimension_numbers=(((1,), (0,)), ((), ())),
                        preferred_element_type=jnp.float32)
    h = h + b1_ref[...]                        # f32 bias add
    if tanh_bf16:
        h = jnp.tanh(h.astype(jnp.bfloat16))   # bf16 EUP (v6e / v7x)
    else:
        h = jnp.tanh(h).astype(jnp.bfloat16)   # f32 EUP (v5e)
    o = lax.dot_general(h, w2t_ref[...],
                        dimension_numbers=(((1,), (0,)), ((), ())),
                        preferred_element_type=jnp.float32)
    o_ref[...] = o.astype(o_ref.dtype)


def _mlp_kernel_htiled(x_ref, w1t_ref, b1_ref, w2t_ref, o_ref, acc_ref, *, tanh_bf16):
    # Grid: (batch tiles, H tiles). Partial W2 contributions accumulate over H.
    h_idx = pl.program_id(1)

    @pl.when(h_idx == 0)
    def _():
        acc_ref[...] = jnp.zeros_like(acc_ref)

    x = x_ref[...].astype(jnp.bfloat16)
    h = lax.dot_general(x, w1t_ref[...],
                        dimension_numbers=(((1,), (0,)), ((), ())),
                        preferred_element_type=jnp.float32)
    h = h + b1_ref[...]
    if tanh_bf16:
        h = jnp.tanh(h.astype(jnp.bfloat16))
    else:
        h = jnp.tanh(h).astype(jnp.bfloat16)
    acc_ref[...] += lax.dot_general(h, w2t_ref[...],
                                    dimension_numbers=(((1,), (0,)), ((), ())),
                                    preferred_element_type=jnp.float32)

    @pl.when(h_idx == pl.num_programs(1) - 1)
    def _():
        o_ref[...] = acc_ref[...].astype(o_ref.dtype)


# ---------------------------------------------------------------------------
# Wrapper
# ---------------------------------------------------------------------------
def prepare_mlp_params(w1, b1, w2):
    """One-time weight prep (hoist out of the per-forward path).

    Zero-pads D/H/C to multiples of 128 lanes, transposes to [in, out] so the
    kernel runs plain NN matmuls, and pre-casts the matmul operands to bf16.
    Zero padding is exact: padded K columns contribute 0, padded H rows give
    tanh(0)=0 against zeroed W2 rows, padded C columns are sliced off at the end.
    """
    H, D_in = w1.shape
    C, H2 = w2.shape
    assert H2 == H and b1.shape == (H,)
    Dp, Hp, Cp = _round_up(D_in, 128), _round_up(H, 128), _round_up(C, 128)
    w1t = jnp.pad(w1.astype(jnp.bfloat16), ((0, Hp - H), (0, Dp - D_in))).T   # [Dp, Hp]
    w2t = jnp.pad(w2.astype(jnp.bfloat16), ((0, Cp - C), (0, Hp - H))).T      # [Hp, Cp]
    b1p = jnp.pad(b1.astype(jnp.float32), (0, Hp - H)).reshape(1, Hp)         # f32 bias
    return w1t, b1p, w2t


def _choose_h_tile(Hp, Dp, Cp, TB, budget):
    """Largest multiple-of-128 divisor of Hp whose per-step footprint fits."""
    f32, bf16 = 4, 2
    n = Hp // 128
    for k in range(n, 0, -1):
        if n % k:
            continue
        Ht = 128 * k
        need = (
            2 * (Dp * Ht + Ht * Cp) * bf16      # double-buffered streamed weight tiles
            + 2 * Ht * f32                      # bias tiles
            + 2 * TB * (Dp + Cp) * f32          # double-buffered x / o tiles
            + TB * Cp * f32                     # accumulator scratch
            + TB * Ht * (f32 + bf16) + TB * Dp * bf16   # in-kernel temporaries
        )
        if need <= int(0.75 * budget):
            return Ht
    return 128


@functools.partial(jax.jit,
                   static_argnames=("num_class", "batch_tile", "force_tiled", "h_tile"))
def mlp_forward(x, w1t, b1p, w2t, *, num_class, batch_tile=512,
                force_tiled=False, h_tile=None):
    """
    x   : [B, D_in] activations (f32 or bf16)
    w1t : [Dp, Hp] bf16, b1p : [1, Hp] f32, w2t : [Hp, Cp] bf16  (from prepare_mlp_params)
    returns o : [B, num_class] in x.dtype
    """
    B, D_in = x.shape
    Dp, Hp = w1t.shape
    Cp = w2t.shape[1]

    vmem_cap, tanh_bf16 = _tpu_generation_info()
    budget = int(vmem_cap * 0.85)            # headroom for Mosaic internal scratch

    # Batch tile: minimize last-tile padding, amortize per-grid-step overhead.
    n_tiles = max(1, _cdiv(B, batch_tile))
    TB = _round_up(_cdiv(B, n_tiles), 8)
    Bp = n_tiles * TB

    xp = x if (Bp == B and Dp == D_in) else jnp.pad(x, ((0, Bp - B), (0, Dp - D_in)))

    f32, bf16 = 4, 2
    resident_weights = (Hp * Dp + Hp * Cp) * bf16 + Hp * f32
    # Single-buffer the resident weights once the second buffer would cost real VMEM.
    single_buffer = resident_weights > (2 << 20) and _single_buffering_supported()
    weight_buf = 1 if single_buffer else 2
    resident_bytes = (
        weight_buf * resident_weights
        + 2 * TB * (Dp + Cp) * f32                               # double-buffered x / o tiles
        + TB * Hp * (f32 + bf16) + TB * Dp * bf16 + TB * Cp * f32  # in-kernel temporaries
    )
    use_resident = (not force_tiled) and resident_bytes <= int(0.75 * budget)

    if use_resident:
        kernel = functools.partial(_mlp_kernel_resident, tanh_bf16=tanh_bf16)
        vmem_limit = int(min(budget, max(32 * 1024 * 1024, 2 * resident_bytes)))
        out = pl.pallas_call(
            kernel,
            out_shape=jax.ShapeDtypeStruct((Bp, Cp), x.dtype),
            grid=(Bp // TB,),
            in_specs=[
                pl.BlockSpec((TB, Dp), lambda i: (i, 0)),        # streamed batch tile
                _resident_spec((Dp, Hp), single_buffer),         # W1^T resident
                _resident_spec((1, Hp), single_buffer),          # b1 resident
                _resident_spec((Hp, Cp), single_buffer),         # W2^T resident
            ],
            out_specs=pl.BlockSpec((TB, Cp), lambda i: (i, 0)),
            compiler_params=pltpu.CompilerParams(
                dimension_semantics=("parallel",),
                vmem_limit_bytes=vmem_limit,
            ),
        )(xp, w1t, b1p, w2t)
    else:
        # Fallback for weights too large to hold resident (e.g. v7x 64 MiB VMEM):
        # stream H-tiles of both weight matrices and accumulate in f32 scratch.
        if h_tile is not None and h_tile % 128 == 0 and Hp % h_tile == 0:
            Ht = int(h_tile)
        else:
            Ht = _choose_h_tile(Hp, Dp, Cp, TB, budget)
        kernel = functools.partial(_mlp_kernel_htiled, tanh_bf16=tanh_bf16)
        out = pl.pallas_call(
            kernel,
            out_shape=jax.ShapeDtypeStruct((Bp, Cp), x.dtype),
            grid=(Bp // TB, Hp // Ht),
            in_specs=[
                pl.BlockSpec((TB, Dp), lambda i, h: (i, 0)),
                pl.BlockSpec((Dp, Ht), lambda i, h: (0, h)),
                pl.BlockSpec((1, Ht), lambda i, h: (0, h)),
                pl.BlockSpec((Ht, Cp), lambda i, h: (h, 0)),
            ],
            out_specs=pl.BlockSpec((TB, Cp), lambda i, h: (i, 0)),
            scratch_shapes=[pltpu.VMEM((TB, Cp), jnp.float32)],
            compiler_params=pltpu.CompilerParams(
                dimension_semantics=("parallel", "arbitrary"),
                vmem_limit_bytes=budget,
            ),
        )(xp, w1t, b1p, w2t)

    return out[:B, :num_class]


if __name__ == "__main__":
    key = jax.random.PRNGKey(0)
    kx, kw1, kb1, kw2, kx2, kw12, kb12, kw22 = jax.random.split(key, 8)

    # ---- Test 1: small shapes consistent with MLPFunc(input_size, hidden_size,
    #      num_class); exercises the resident-weight fast path.
    batch, input_size, hidden_size, num_class = 2, 32, 32, 8
    bound1 = 1.0 / (input_size ** 0.5)
    bound2 = 1.0 / (hidden_size ** 0.5)
    x = jax.random.normal(kx, (batch, input_size), dtype=jnp.float32)
    w1 = jax.random.uniform(kw1, (hidden_size, input_size), jnp.float32, -bound1, bound1)
    b1 = jax.random.uniform(kb1, (hidden_size,), jnp.float32, -bound1, bound1)
    w2 = jax.random.uniform(kw2, (num_class, hidden_size), jnp.float32, -bound2, bound2)

    w1t, b1p, w2t = prepare_mlp_params(w1, b1, w2)          # one-time weight prep
    o = mlp_forward(x, w1t, b1p, w2t, num_class=num_class)
    o = jax.block_until_ready(o)

    o_ref = jnp.tanh(x @ w1.T + b1) @ w2.T                   # eval-mode reference
    assert o.shape == (batch, num_class)
    assert jnp.allclose(o, o_ref, atol=2e-2, rtol=2e-2), (
        f"resident path: max abs err = {float(jnp.max(jnp.abs(o - o_ref)))}")

    # ---- Test 2: exercise the H-tiled fallback path (multi-step accumulation).
    batch2, input2, hidden2, classes2 = 4, 64, 256, 16
    c1 = 1.0 / (input2 ** 0.5)
    c2 = 1.0 / (hidden2 ** 0.5)
    x2 = jax.random.normal(kx2, (batch2, input2), dtype=jnp.float32)
    w1_2 = jax.random.uniform(kw12, (hidden2, input2), jnp.float32, -c1, c1)
    b1_2 = jax.random.uniform(kb12, (hidden2,), jnp.float32, -c1, c1)
    w2_2 = jax.random.uniform(kw22, (classes2, hidden2), jnp.float32, -c2, c2)

    w1t2, b1p2, w2t2 = prepare_mlp_params(w1_2, b1_2, w2_2)
    o2 = mlp_forward(x2, w1t2, b1p2, w2t2, num_class=classes2,
                     force_tiled=True, h_tile=128)
    o2 = jax.block_until_ready(o2)

    # bf16-emulated reference (kernel uses bf16 MXU inputs with f32 accumulation).
    xb = x2.astype(jnp.bfloat16).astype(jnp.float32)
    w1b = w1_2.astype(jnp.bfloat16).astype(jnp.float32)
    w2b = w2_2.astype(jnp.bfloat16).astype(jnp.float32)
    h_ref = jnp.tanh(xb @ w1b.T + b1_2).astype(jnp.bfloat16).astype(jnp.float32)
    o2_ref = h_ref @ w2b.T
    assert o2.shape == (batch2, classes2)
    assert jnp.allclose(o2, o2_ref, atol=3e-2, rtol=3e-2), (
        f"H-tiled path: max abs err = {float(jnp.max(jnp.abs(o2 - o2_ref)))}")

    print("KERNEL_OK")
</pallas_src>

<mosaic_0001>
module attributes {stable_mosaic.version = 11 : i64} {
  func.func @_mlp_kernel_resident(%arg0: i32, %arg1: memref<8x128xf32, #tpu.memory_space<vmem>>, %arg2: memref<128x128xbf16, #tpu.memory_space<vmem>>, %arg3: memref<1x128xf32, #tpu.memory_space<vmem>>, %arg4: memref<128x128xbf16, #tpu.memory_space<vmem>>, %arg5: memref<8x128xf32, #tpu.memory_space<vmem>>) attributes {dimension_semantics = [#tpu.dimension_semantics<parallel>], iteration_bounds = array<i64: 1>, scalar_prefetch = 0 : i64, scratch_operands = 0 : i64, tpu.core_type = #tpu.core_type<tc>, window_params = [{transform_indices = @transform_0, window_bounds = array<i64: 8, 128>}, {pipeline_mode = #tpu.pipeline_mode<synchronous>, transform_indices = @transform_1, window_bounds = array<i64: 128, 128>}, {pipeline_mode = #tpu.pipeline_mode<synchronous>, transform_indices = @transform_2, window_bounds = array<i64: 1, 128>}, {pipeline_mode = #tpu.pipeline_mode<synchronous>, transform_indices = @transform_3, window_bounds = array<i64: 128, 128>}, {transform_indices = @transform_4, window_bounds = array<i64: 8, 128>}]} {
    %c0 = arith.constant 0 : index
    %c0_0 = arith.constant 0 : index
    %0 = vector.load %arg1[%c0, %c0_0] : memref<8x128xf32, #tpu.memory_space<vmem>>, vector<8x128xf32>
    %1 = arith.truncf %0 : vector<8x128xf32> to vector<8x128xbf16>
    %c0_1 = arith.constant 0 : index
    %c0_2 = arith.constant 0 : index
    %2 = vector.load %arg2[%c0_1, %c0_2] : memref<128x128xbf16, #tpu.memory_space<vmem>>, vector<128x128xbf16>
    %cst = arith.constant dense<0.000000e+00> : vector<8x128xf32>
    %3 = tpu.matmul %1, %2, %cst {dimension_numbers = #tpu.dot_dimension_numbers<[1], [0], [0], [1], [0, 0, 1, 1], [], []>} : vector<8x128xbf16>, vector<128x128xbf16>, vector<8x128xf32> -> vector<8x128xf32>
    %c0_3 = arith.constant 0 : index
    %c0_4 = arith.constant 0 : index
    %4 = vector.load %arg3[%c0_3, %c0_4] : memref<1x128xf32, #tpu.memory_space<vmem>>, vector<1x128xf32>
    %5 = vector.broadcast %4 : vector<1x128xf32> to vector<8x128xf32>
    %6 = arith.addf %3, %5 : vector<8x128xf32>
    %7 = arith.truncf %6 : vector<8x128xf32> to vector<8x128xbf16>
    %8 = math.tanh %7 : vector<8x128xbf16>
    %c0_5 = arith.constant 0 : index
    %c0_6 = arith.constant 0 : index
    %9 = vector.load %arg4[%c0_5, %c0_6] : memref<128x128xbf16, #tpu.memory_space<vmem>>, vector<128x128xbf16>
    %cst_7 = arith.constant dense<0.000000e+00> : vector<8x128xf32>
    %10 = tpu.matmul %8, %9, %cst_7 {dimension_numbers = #tpu.dot_dimension_numbers<[1], [0], [0], [1], [0, 0, 1, 1], [], []>} : vector<8x128xbf16>, vector<128x128xbf16>, vector<8x128xf32> -> vector<8x128xf32>
    %c0_8 = arith.constant 0 : index
    %c0_9 = arith.constant 0 : index
    %11 = vector.load %arg5[%c0_8, %c0_9] : memref<8x128xf32, #tpu.memory_space<vmem>>, vector<8x128xf32>
    tpu.vector_store %arg5[%c0_8, %c0_9], %10 {strides = array<i32>} : memref<8x128xf32, #tpu.memory_space<vmem>>, vector<8x128xf32>,
    return
  }
  func.func @transform_0(%arg0: i32) -> (i32, i32) {
    %c0_i32 = arith.constant 0 : i32
    %c0_i32_0 = arith.constant 0 : i32
    return %arg0, %c0_i32 : i32, i32
  }
  func.func @transform_1(%arg0: i32) -> (i32, i32) {
    %c0_i32 = arith.constant 0 : i32
    %c0_i32_0 = arith.constant 0 : i32
    %c0_i32_1 = arith.constant 0 : i32
    return %c0_i32, %c0_i32_0 : i32, i32
  }
  func.func @transform_2(%arg0: i32) -> (i32, i32) {
    %c0_i32 = arith.constant 0 : i32
    %c0_i32_0 = arith.constant 0 : i32
    %c0_i32_1 = arith.constant 0 : i32
    return %c0_i32, %c0_i32_0 : i32, i32
  }
  func.func @transform_3(%arg0: i32) -> (i32, i32) {
    %c0_i32 = arith.constant 0 : i32
    %c0_i32_0 = arith.constant 0 : i32
    %c0_i32_1 = arith.constant 0 : i32
    return %c0_i32, %c0_i32_0 : i32, i32
  }
  func.func @transform_4(%arg0: i32) -> (i32, i32) {
    %c0_i32 = arith.constant 0 : i32
    %c0_i32_0 = arith.constant 0 : i32
    return %arg0, %c0_i32 : i32, i32
  }
}

</mosaic_0001>

<llo_original>
// kernel: mlp_forward.1
$region0: #{mlp_forward.1}
  #allocation0 [shape = 'u32[]', space=smem, size = 0x4, offset = 0x4, fixed_abs, tag = 'smem constant byte address 0x4 - core index']
  #allocation1 [shape = 'u32[144,128]{1,0:T(1,128)}', space=vmem, size = 0x12000, scoped, tag = 'internal scratch']
  %s0 = inlined_call_operand.vmem [shape: f32[8,128], index: 0, kind: input, shape index: {}]
  %s1 = inlined_call_operand.hbm [shape: bf16[128,128], index: 1, kind: input, shape index: {}]
  %s2 = inlined_call_operand.vmem [shape: f32[1,128], index: 2, kind: input, shape index: {}]
  %s3 = inlined_call_operand.hbm [shape: bf16[128,128], index: 3, kind: input, shape index: {}]
  %s4 = inlined_call_operand.vmem [shape: f32[8,128], index: 4, kind: output, shape index: {}]
  %s5 = sld [smem:[#allocation0]]
  $region34: #{mlp_forward.1} parent=0
    _
  %s7 = ssub.s32 1, %s5
  %s8 = scalar_select 0, %s7, %s5
  $region1: #{mlp_forward.1} parent=0
    #allocation2 [shape = 'u8[32768]{0}', space=vmem, size = 0x8000, scoped, tag = 'input window, operand 1, single buffered']
    #allocation3 [shape = 's32[1]{0}', space=sflag, size = 0x4, scoped, tag = 'scoped memory for mlp_forward.1']
    #allocation4 [shape = 'u8[32768]{0}', space=vmem, size = 0x8000, scoped, tag = 'input window, operand 3, single buffered']
    #allocation5 [shape = 's32[1]{0}', space=sflag, size = 0x4, scoped, tag = 'scoped memory for mlp_forward.1']
    %9 = vsyncpa [#allocation3], 0
    %10 = vsyncpa [#allocation5], 0
    // Predicated region
    $region2: #{mlp_forward.1} parent=1 // pred_check
      _
    $region3: #{mlp_forward.1} parent=1 // pred_check_branch
      %12 = sbr.rel (0) target = $region5
    $region4: #{mlp_forward.1} parent=1 // pred_region
      _
    $region5: #{mlp_forward.1} parent=1 // pred_fallthru
      _
    // Predicated region
    $region6: #{mlp_forward.1} parent=1 // pred_check
      _
    $region7: #{mlp_forward.1} parent=1 // pred_check_branch
      %14 = sbr.rel (0) target = $region9
    $region8: #{mlp_forward.1} parent=1 // pred_region
      %s16 = ssub.s32 1024, 1024
      %17 = vsyncadd [#allocation3], %s16
      %s18 = sshll.u32 [#allocation2], 4
      %s19 = int_to_ptr.vmem [resolvable:$true] %s18
      %24 = dma.hbm_to_vmem [thread:$0]  %s1, 1024, %s19, [#allocation3], 64, 64, 4
    $region9: #{mlp_forward.1} parent=1 // pred_fallthru
      _
    // Predicated region
    $region10: #{mlp_forward.1} parent=1 // pred_check
      _
    $region11: #{mlp_forward.1} parent=1 // pred_check_branch
      %26 = sbr.rel (0) target = $region13
    $region12: #{mlp_forward.1} parent=1 // pred_region
      _
    $region13: #{mlp_forward.1} parent=1 // pred_fallthru
      _
    // Predicated region
    $region14: #{mlp_forward.1} parent=1 // pred_check
      _
    $region15: #{mlp_forward.1} parent=1 // pred_check_branch
      %28 = sbr.rel (0) target = $region17
    $region16: #{mlp_forward.1} parent=1 // pred_region
      %s30 = ssub.s32 1024, 1024
      %31 = vsyncadd [#allocation5], %s30
      %s32 = sshll.u32 [#allocation4], 4
      %s33 = int_to_ptr.vmem [resolvable:$true] %s32
      %38 = dma.hbm_to_vmem [thread:$0]  %s3, 1024, %s33, [#allocation5], 64, 64, 4
    $region17: #{mlp_forward.1} parent=1 // pred_fallthru
      _
    // Predicated region
    $region18: #{mlp_forward.1} parent=1 // pred_check
      _
    $region19: #{mlp_forward.1} parent=1 // pred_check_branch
      %40 = sbr.rel (0) target = $region21
    $region20: #{mlp_forward.1} parent=1 // pred_region
      %41 = dma.done [#allocation3], 1024
    $region21: #{mlp_forward.1} parent=1 // pred_fallthru
      _
    // Predicated region
    $region22: #{mlp_forward.1} parent=1 // pred_check
      _
    $region23: #{mlp_forward.1} parent=1 // pred_check_branch
      %43 = sbr.rel (0) target = $region25
    $region24: #{mlp_forward.1} parent=1 // pred_region
      %44 = dma.done [#allocation5], 1024
    $region25: #{mlp_forward.1} parent=1 // pred_fallthru
      _
    %v46 = vld [vmem:[%s0] sm:$0xff]
    %v47 = vpack.c.bf16 %v46, %v46
    %v48 = vld [vmem:[#allocation2] sm:$0xf]
    %v49 = vld [vmem:[#allocation2 + $0x4] sm:$0xf]
    %v50 = vld [vmem:[#allocation2 + $0x8] sm:$0xf]
    %v51 = vld [vmem:[#allocation2 + $0xc] sm:$0xf]
    %v52 = vld [vmem:[#allocation2 + $0x10] sm:$0xf]
    %v53 = vld [vmem:[#allocation2 + $0x14] sm:$0xf]
    %v54 = vld [vmem:[#allocation2 + $0x18] sm:$0xf]
    %v55 = vld [vmem:[#allocation2 + $0x1c] sm:$0xf]
    %v56 = vld [vmem:[#allocation2 + $0x20] sm:$0xf]
    %v57 = vld [vmem:[#allocation2 + $0x24] sm:$0xf]
    %v58 = vld [vmem:[#allocation2 + $0x28] sm:$0xf]
    %v59 = vld [vmem:[#allocation2 + $0x2c] sm:$0xf]
    %v60 = vld [vmem:[#allocation2 + $0x30] sm:$0xf]
    %v61 = vld [vmem:[#allocation2 + $0x34] sm:$0xf]
    %v62 = vld [vmem:[#allocation2 + $0x38] sm:$0xf]
    %v63 = vld [vmem:[#allocation2 + $0x3c] sm:$0xf]
    %v64 = vld [vmem:[%s2] sm:$0x1]
    %v66 = vlaneseq
    %v67 = vshrl.u32 %v66, 7
    %v68 = vsub.s32 0, %v67
    %v69 = vrot.slane %v64, %v68
    %v87 = vunpack.c.l.b16 %v48
    %v88 = vunpack.c.l.b16 %v49
    %v89 = vunpack.c.l.b16 %v50
    %v90 = vunpack.c.l.b16 %v51
    %v91 = vunpack.c.l.b16 %v52
    %v92 = vunpack.c.l.b16 %v53
    %v93 = vunpack.c.l.b16 %v54
    %v94 = vunpack.c.l.b16 %v55
    %v95 = vunpack.c.l.b16 %v56
    %v96 = vunpack.c.l.b16 %v57
    %v97 = vunpack.c.l.b16 %v58
    %v98 = vunpack.c.l.b16 %v59
    %v99 = vunpack.c.l.b16 %v60
    %v100 = vunpack.c.l.b16 %v61
    %v101 = vunpack.c.l.b16 %v62
    %v102 = vunpack.c.l.b16 %v63
    %v103 = vpack.c.b16 %v88, %v87
    %v104 = vpack.c.b16 %v90, %v89
    %v105 = vpack.c.b16 %v92, %v91
    %v106 = vpack.c.b16 %v94, %v93
    %v107 = vpack.c.b16 %v96, %v95
    %v108 = vpack.c.b16 %v98, %v97
    %v109 = vpack.c.b16 %v100, %v99
    %v110 = vpack.c.b16 %v102, %v101
    %119 = vmatprep.subr.bf16.mxu0 0
    %120 = vmatpush1.bf16.msra.mxu0 %v103
    %121 = vmatprep.subr.bf16.mxu0 0
    %122 = vmatpush1.bf16.msra.mxu0 %v104
    %123 = vmatprep.subr.bf16.mxu0 0
    %124 = vmatpush1.bf16.msra.mxu0 %v105
    %125 = vmatprep.subr.bf16.mxu0 0
    %126 = vmatpush1.bf16.msra.mxu0 %v106
    %127 = vmatprep.subr.bf16.mxu0 0
    %128 = vmatpush1.bf16.msra.mxu0 %v107
    %129 = vmatprep.subr.bf16.mxu0 0
    %130 = vmatpush1.bf16.msra.mxu0 %v108
    %131 = vmatprep.subr.bf16.mxu0 0
    %132 = vmatpush1.bf16.msra.mxu0 %v109
    %133 = vmatprep.subr.bf16.mxu0 0
    %134 = vmatpush1.bf16.msra.mxu0 %v110
    %135 = vmatprep.subr.bf16.mxu0 0
    %136 = vmatpush1.bf16.msra.mxu0 0
    %137 = vmatprep.subr.bf16.mxu0 0
    %138 = vmatpush1.bf16.msra.mxu0 0
    %139 = vmatprep.subr.bf16.mxu0 0
    %140 = vmatpush1.bf16.msra.mxu0 0
    %141 = vmatprep.subr.bf16.mxu0 0
    %142 = vmatpush1.bf16.msra.mxu0 0
    %143 = vmatprep.subr.bf16.mxu0 0
    %144 = vmatpush1.bf16.msra.mxu0 0
    %145 = vmatprep.subr.bf16.mxu0 0
    %146 = vmatpush1.bf16.msra.mxu0 0
    %147 = vmatprep.subr.bf16.mxu0 0
    %148 = vmatpush1.bf16.msra.mxu0 0
    %149 = vmatprep.subr.bf16.mxu0 0
    %150 = vmatpush1.bf16.msra.mxu0 0
    %151 = vmatprep.mubr.bf16.mxu0 0
    %152 = vmatmul.mubr.bf16.gmra.mrb[0].mxu0 %v47
    %v153 = vpop.f32.mrb[0].mxu0
    %v154 = vadd.f32 %v69, %v153
    %v155 = vpop.f32.mrb[0].mxu0
    %v156 = vpop.f32.mrb[0].mxu0
    %v157 = vpop.f32.mrb[0].mxu0
    %158 = vdwg.mxu0
    %v159 = vpack.c.bf16 %v154, %v154
    %v160 = vtanh.bf16.pop %v159
    %v161 = vld [vmem:[#allocation4] sm:$0xf]
    %v162 = vld [vmem:[#allocation4 + $0x4] sm:$0xf]
    %v163 = vld [vmem:[#allocation4 + $0x8] sm:$0xf]
    %v164 = vld [vmem:[#allocation4 + $0xc] sm:$0xf]
    %v165 = vld [vmem:[#allocation4 + $0x10] sm:$0xf]
    %v166 = vld [vmem:[#allocation4 + $0x14] sm:$0xf]
    %v167 = vld [vmem:[#allocation4 + $0x18] sm:$0xf]
    %v168 = vld [vmem:[#allocation4 + $0x1c] sm:$0xf]
    %v169 = vld [vmem:[#allocation4 + $0x20] sm:$0xf]
    %v170 = vld [vmem:[#allocation4 + $0x24] sm:$0xf]
    %v171 = vld [vmem:[#allocation4 + $0x28] sm:$0xf]
    %v172 = vld [vmem:[#allocation4 + $0x2c] sm:$0xf]
    %v173 = vld [vmem:[#allocation4 + $0x30] sm:$0xf]
    %v174 = vld [vmem:[#allocation4 + $0x34] sm:$0xf]
    %v175 = vld [vmem:[#allocation4 + $0x38] sm:$0xf]
    %v176 = vld [vmem:[#allocation4 + $0x3c] sm:$0xf]
    %v193 = vunpack.c.l.b16 %v161
    %v194 = vunpack.c.l.b16 %v162
    %v195 = vunpack.c.l.b16 %v163
    %v196 = vunpack.c.l.b16 %v164
    %v197 = vunpack.c.l.b16 %v165
    %v198 = vunpack.c.l.b16 %v166
    %v199 = vunpack.c.l.b16 %v167
    %v200 = vunpack.c.l.b16 %v168
    %v201 = vunpack.c.l.b16 %v169
    %v202 = vunpack.c.l.b16 %v170
    %v203 = vunpack.c.l.b16 %v171
    %v204 = vunpack.c.l.b16 %v172
    %v205 = vunpack.c.l.b16 %v173
    %v206 = vunpack.c.l.b16 %v174
    %v207 = vunpack.c.l.b16 %v175
    %v208 = vunpack.c.l.b16 %v176
    %v209 = vpack.c.b16 %v194, %v193
    %v210 = vpack.c.b16 %v196, %v195
    %v211 = vpack.c.b16 %v198, %v197
    %v212 = vpack.c.b16 %v200, %v199
    %v213 = vpack.c.b16 %v202, %v201
    %v214 = vpack.c.b16 %v204, %v203
    %v215 = vpack.c.b16 %v206, %v205
    %v216 = vpack.c.b16 %v208, %v207
    %225 = vmatprep.subr.bf16.mxu0 0
    %226 = vmatpush1.bf16.msra.mxu0 %v209
    %227 = vmatprep.subr.bf16.mxu0 0
    %228 = vmatpush1.bf16.msra.mxu0 %v210
    %229 = vmatprep.subr.bf16.mxu0 0
    %230 = vmatpush1.bf16.msra.mxu0 %v211
    %231 = vmatprep.subr.bf16.mxu0 0
    %232 = vmatpush1.bf16.msra.mxu0 %v212
    %233 = vmatprep.subr.bf16.mxu0 0
    %234 = vmatpush1.bf16.msra.mxu0 %v213
    %235 = vmatprep.subr.bf16.mxu0 0
    %236 = vmatpush1.bf16.msra.mxu0 %v214
    %237 = vmatprep.subr.bf16.mxu0 0
    %238 = vmatpush1.bf16.msra.mxu0 %v215
    %239 = vmatprep.subr.bf16.mxu0 0
    %240 = vmatpush1.bf16.msra.mxu0 %v216
    %241 = vmatprep.subr.bf16.mxu0 0
    %242 = vmatpush1.bf16.msra.mxu0 0
    %243 = vmatprep.subr.bf16.mxu0 0
    %244 = vmatpush1.bf16.msra.mxu0 0
    %245 = vmatprep.subr.bf16.mxu0 0
    %246 = vmatpush1.bf16.msra.mxu0 0
    %247 = vmatprep.subr.bf16.mxu0 0
    %248 = vmatpush1.bf16.msra.mxu0 0
    %249 = vmatprep.subr.bf16.mxu0 0
    %250 = vmatpush1.bf16.msra.mxu0 0
    %251 = vmatprep.subr.bf16.mxu0 0
    %252 = vmatpush1.bf16.msra.mxu0 0
    %253 = vmatprep.subr.bf16.mxu0 0
    %254 = vmatpush1.bf16.msra.mxu0 0
    %255 = vmatprep.subr.bf16.mxu0 0
    %256 = vmatpush1.bf16.msra.mxu0 0
    %257 = vmatprep.mubr.bf16.mxu0 0
    %258 = vmatmul.mubr.bf16.gmra.mrb[0].mxu0 %v160
    %v259 = vpop.f32.mrb[0].mxu0
    %v260 = vadd.f32 0.0, %v259
    %v261 = vpop.f32.mrb[0].mxu0
    %v262 = vpop.f32.mrb[0].mxu0
    %v263 = vpop.f32.mrb[0].mxu0
    %264 = vdwg.mxu0
    %265 = vst [vmem:[%s4] sm:$0xff] %v260
    // Predicated region
    $region26: #{mlp_forward.1} parent=1 // pred_check
      _
    $region27: #{mlp_forward.1} parent=1 // pred_check_branch
      %267 = sbr.rel (0) target = $region29
    $region28: #{mlp_forward.1} parent=1 // pred_region
      _
    $region29: #{mlp_forward.1} parent=1 // pred_fallthru
      _
    // Predicated region
    $region30: #{mlp_forward.1} parent=1 // pred_check
      _
    $region31: #{mlp_forward.1} parent=1 // pred_check_branch
      %269 = sbr.rel (0) target = $region33
    $region32: #{mlp_forward.1} parent=1 // pred_region
      _
    $region33: #{mlp_forward.1} parent=1 // pred_fallthru
      _
    %270 = vsyncpa [#allocation3], 1
    %271 = vsyncpa [#allocation5], 1

</llo_original>
